<compile_context>
chip_gen: v5e
topology: v5e:2x2
jax: 0.10.0
libtpu: 0.0.40
codegen_flags: <defaults>
</compile_context>

<pallas_src>
import functools

import jax
import jax.numpy as jnp
from jax.experimental import pallas as pl
from jax.experimental.pallas import tpu as pltpu


OUT_LANES = 8  # fc4 output zero-padded 5 -> 8 lanes (full-dim out block)


def classifier_kernel(conv_ref,                  # SMEM (2,): [conv_w, conv_b]
                      x_ref,                     # (TILE_B, 16) native dtype (cols 14,15 zero)
                      img_ref,                   # (TILE_B, HW) native dtype
                      w1x_ref, w1m_ref, b1_ref,  # (16,256) bf16, (1,256) f32, (1,256) f32
                      w2_ref, b2_ref,            # (256,128) bf16, (1,128) f32
                      w3_ref, b3_ref,            # (128,128) bf16, (1,128) f32
                      w4_ref, b4_ref,            # (128,8) bf16, (1,8) f32
                      out_ref):                  # (TILE_B, 8) f32
    conv_w = conv_ref[0]
    conv_b = conv_ref[1]

    # --- 1x1 conv (scalar affine) + ReLU + spatial mean -> (TILE_B, 1), f32 accum ---
    img = img_ref[...].astype(jnp.float32)                 # cast after the DMA
    img = jnp.maximum(img * conv_w + conv_b, 0.0)
    img_mean = jnp.mean(img, axis=1, keepdims=True)        # (TILE_B, 1)

    # --- fc1 on cat([x, mean]) without materializing the concat:
    #     cat(x, m) @ W1 == x_pad @ W1x_pad + m * W1_row14   (padded entries are zero)
    x = x_ref[...].astype(jnp.bfloat16)
    h = (jnp.dot(x, w1x_ref[...], preferred_element_type=jnp.float32)
         + img_mean * w1m_ref[...]
         + b1_ref[...])
    h = jnp.maximum(h, 0.0)

    # --- fc2 + ReLU (bf16 MXU, f32 accumulation) ---
    h = jnp.dot(h.astype(jnp.bfloat16), w2_ref[...],
                preferred_element_type=jnp.float32) + b2_ref[...]
    h = jnp.maximum(h, 0.0)

    # --- fc3 + ReLU ---
    h = jnp.dot(h.astype(jnp.bfloat16), w3_ref[...],
                preferred_element_type=jnp.float32) + b3_ref[...]
    h = jnp.maximum(h, 0.0)

    # --- fc4 (no activation), 8 padded output lanes ---
    out_ref[...] = (jnp.dot(h.astype(jnp.bfloat16), w4_ref[...],
                            preferred_element_type=jnp.float32) + b4_ref[...])


def _pick_tile_b(B, HW, img_itemsize, sub):
    """HW-aware batch tile: a few MiB of image data per grid step, VMEM-safe."""
    budget = 16 * 1024 * 1024                       # double-buffered image block budget
    t = budget // max(1, 2 * HW * img_itemsize)
    t = max(sub, min(int(t), 2048))
    if B >= 2 * sub:                                # >=2 grid steps -> v7x megacore split
        half = (-(-((B + 1) // 2) // sub)) * sub
        t = min(t, half)
    t = min(t, (-(-B // sub)) * sub)                # no bigger than the (padded) batch
    return max(sub, (t // sub) * sub)


@jax.jit
def classifier_forward(x, images, params):
    """x: (B, 14); images: (B, 1, H, W) NCHW (any float dtype). Returns (B, 5) f32."""
    B = x.shape[0]
    H, W = images.shape[2], images.shape[3]
    HW = H * W

    f32, bf16 = jnp.float32, jnp.bfloat16
    x_itemsize = jnp.dtype(x.dtype).itemsize
    img_itemsize = jnp.dtype(images.dtype).itemsize
    sub = 8 * max(1, 4 // min(x_itemsize, img_itemsize))    # sublane multiple per dtype
    tile_b = _pick_tile_b(B, HW, img_itemsize, sub)
    num_tiles = pl.cdiv(B, tile_b)

    # Dominant stream: free metadata reshape only -- no padded HBM copy.
    img_flat = images.reshape(B, HW)

    # x is tiny: zero-pad the lane dim 14 -> 16 so the fc1 split needs no odd slices.
    x_pad = jnp.zeros((B, 16), x.dtype).at[:, :14].set(x)

    def _row(b):
        return jnp.asarray(b, f32).reshape(1, -1)            # accepts (out,) or (1, out)

    # fc1 weight split: rows 0..13 (zero-padded to 16, bf16) for x; row 14 for the mean.
    w1 = jnp.asarray(params["w1"], f32)                       # (15, 256), stored (in, out)
    w1x = jnp.zeros((16, 256), bf16).at[:14].set(w1[:14].astype(bf16))
    w1m = w1[14:15]                                           # (1, 256) f32 (VPU path)

    w2 = jnp.asarray(params["w2"], bf16)                      # (256, 128)
    w3 = jnp.asarray(params["w3"], bf16)                      # (128, 128)
    w4p = jnp.zeros((128, OUT_LANES), bf16).at[:, :5].set(jnp.asarray(params["w4"], bf16))
    b4p = jnp.zeros((1, OUT_LANES), f32).at[:, :5].set(_row(params["b4"]))

    conv_scalars = jnp.stack([jnp.asarray(params["conv_w"], f32),
                              jnp.asarray(params["conv_b"], f32)])

    def resident(shape):
        # Constant block index -> DMA'd once, stays resident across grid steps.
        return pl.BlockSpec(shape, lambda i, s: (0, 0))

    grid_spec = pltpu.PrefetchScalarGridSpec(
        num_scalar_prefetch=1,                    # conv scalars land in SMEM
        grid=(num_tiles,),
        in_specs=[
            pl.BlockSpec((tile_b, 16), lambda i, s: (i, 0)),   # x
            pl.BlockSpec((tile_b, HW), lambda i, s: (i, 0)),   # images (dominant stream)
            resident((16, 256)),          # w1x (bf16)
            resident((1, 256)),           # w1m (f32)
            resident((1, 256)),           # b1
            resident((256, 128)),         # w2 (bf16)
            resident((1, 128)),           # b2
            resident((128, 128)),         # w3 (bf16)
            resident((1, 128)),           # b3
            resident((128, OUT_LANES)),   # w4 (bf16, padded)
            resident((1, OUT_LANES)),     # b4 (padded)
        ],
        out_specs=pl.BlockSpec((tile_b, OUT_LANES), lambda i, s: (i, 0)),
    )

    # Explicit VMEM budget: above v5e's 16 MiB scoped default, below v7x's 64 MiB physical.
    weights_bytes = 2 * 2 * (16 * 256 + 256 * 128 + 128 * 128 + 128 * OUT_LANES)
    est_vmem = (2 * tile_b * HW * img_itemsize        # double-buffered image tile
                + 2 * tile_b * 16 * x_itemsize        # double-buffered x tile
                + 2 * tile_b * OUT_LANES * 4          # double-buffered output tile
                + weights_bytes + (2 << 20))          # resident weights + margin
    vmem_limit = int(min(max(est_vmem, 16 << 20), 48 << 20))

    out = pl.pallas_call(
        classifier_kernel,
        out_shape=jax.ShapeDtypeStruct((B, OUT_LANES), f32),
        grid_spec=grid_spec,
        compiler_params=pltpu.CompilerParams(
            dimension_semantics=("parallel",),        # shard batch tiles across TCs (v7x)
            vmem_limit_bytes=vmem_limit,
        ),
    )(conv_scalars,
      x_pad, img_flat,
      w1x, w1m, _row(params["b1"]),
      w2, _row(params["b2"]),
      w3, _row(params["b3"]),
      w4p, b4p)

    return out[:, :5]


def init_params(key):
    """Deterministic init. Linear weights stored as (in, out); biases as (1, out)."""
    def linear(k, fan_in, fan_out):
        kw, kb = jax.random.split(k)
        bound = 1.0 / jnp.sqrt(fan_in)
        w = jax.random.uniform(kw, (fan_in, fan_out), jnp.float32, -bound, bound)
        b = jax.random.uniform(kb, (1, fan_out), jnp.float32, -bound, bound)
        return w, b

    k1, k2, k3, k4, kc = jax.random.split(key, 5)
    w1, b1 = linear(k1, 15, 256)
    w2, b2 = linear(k2, 256, 128)
    w3, b3 = linear(k3, 128, 128)
    w4, b4 = linear(k4, 128, 5)
    kcw, kcb = jax.random.split(kc)
    conv_w = jax.random.uniform(kcw, (), jnp.float32, -1.0, 1.0)
    conv_b = jax.random.uniform(kcb, (), jnp.float32, -1.0, 1.0)
    return dict(w1=w1, b1=b1, w2=w2, b2=b2, w3=w3, b3=b3, w4=w4, b4=b4,
                conv_w=conv_w, conv_b=conv_b)


def reference_forward(x, images, p):
    """Pure-JAX f32 reference matching the PyTorch module."""
    img = jnp.maximum(images.astype(jnp.float32) * p["conv_w"] + p["conv_b"], 0.0)
    img = img.mean(axis=(2, 3))                                  # (B, 1)
    h = jnp.concatenate([x.astype(jnp.float32), img], axis=1)    # (B, 15)
    h = jnp.maximum(h @ p["w1"] + p["b1"], 0.0)
    h = jnp.maximum(h @ p["w2"] + p["b2"], 0.0)
    h = jnp.maximum(h @ p["w3"] + p["b3"], 0.0)
    return h @ p["w4"] + p["b4"]


if __name__ == "__main__":
    key = jax.random.PRNGKey(0)
    kx, kimg, kp = jax.random.split(key, 3)

    B, H, W = 2, 16, 16
    x = jax.random.normal(kx, (B, 14), jnp.float32)
    images = jax.random.normal(kimg, (B, 1, H, W), jnp.float32)   # NCHW
    params = init_params(kp)

    out = classifier_forward(x, images, params)
    out = jax.block_until_ready(out)

    ref = reference_forward(x, images, params)
    assert out.shape == (B, 5)
    # bf16 MXU matmuls with f32 accumulation -> loosened tolerance vs. the f32 reference.
    assert jnp.allclose(out, ref, atol=3e-2, rtol=3e-2), "mismatch vs reference"

    print("KERNEL_OK")
</pallas_src>

<mosaic_0001>
module attributes {stable_mosaic.version = 11 : i64} {
  func.func @classifier_kernel(%arg0: i32, %arg1: memref<2xf32, #tpu.memory_space<smem>>, %arg2: memref<8x16xf32, #tpu.memory_space<vmem>>, %arg3: memref<8x256xf32, #tpu.memory_space<vmem>>, %arg4: memref<16x256xbf16, #tpu.memory_space<vmem>>, %arg5: memref<1x256xf32, #tpu.memory_space<vmem>>, %arg6: memref<1x256xf32, #tpu.memory_space<vmem>>, %arg7: memref<256x128xbf16, #tpu.memory_space<vmem>>, %arg8: memref<1x128xf32, #tpu.memory_space<vmem>>, %arg9: memref<128x128xbf16, #tpu.memory_space<vmem>>, %arg10: memref<1x128xf32, #tpu.memory_space<vmem>>, %arg11: memref<128x8xbf16, #tpu.memory_space<vmem>>, %arg12: memref<1x8xf32, #tpu.memory_space<vmem>>, %arg13: memref<8x8xf32, #tpu.memory_space<vmem>>) attributes {dimension_semantics = [#tpu.dimension_semantics<parallel>], iteration_bounds = array<i64: 1>, scalar_prefetch = 1 : i64, scratch_operands = 0 : i64, tpu.core_type = #tpu.core_type<tc>, window_params = [{transform_indices = @transform_0, window_bounds = array<i64: 8, 16>}, {transform_indices = @transform_1, window_bounds = array<i64: 8, 256>}, {pipeline_mode = #tpu.pipeline_mode<synchronous>, transform_indices = @transform_2, window_bounds = array<i64: 16, 256>}, {pipeline_mode = #tpu.pipeline_mode<synchronous>, transform_indices = @transform_3, window_bounds = array<i64: 1, 256>}, {pipeline_mode = #tpu.pipeline_mode<synchronous>, transform_indices = @transform_4, window_bounds = array<i64: 1, 256>}, {pipeline_mode = #tpu.pipeline_mode<synchronous>, transform_indices = @transform_5, window_bounds = array<i64: 256, 128>}, {pipeline_mode = #tpu.pipeline_mode<synchronous>, transform_indices = @transform_6, window_bounds = array<i64: 1, 128>}, {pipeline_mode = #tpu.pipeline_mode<synchronous>, transform_indices = @transform_7, window_bounds = array<i64: 128, 128>}, {pipeline_mode = #tpu.pipeline_mode<synchronous>, transform_indices = @transform_8, window_bounds = array<i64: 1, 128>}, {pipeline_mode = #tpu.pipeline_mode<synchronous>, transform_indices = @transform_9, window_bounds = array<i64: 128, 8>}, {pipeline_mode = #tpu.pipeline_mode<synchronous>, transform_indices = @transform_10, window_bounds = array<i64: 1, 8>}, {transform_indices = @transform_11, window_bounds = array<i64: 8, 8>}]} {
    %c0 = arith.constant 0 : index
    %0 = memref.load %arg1[%c0] : memref<2xf32, #tpu.memory_space<smem>>
    %c1 = arith.constant 1 : index
    %1 = memref.load %arg1[%c1] : memref<2xf32, #tpu.memory_space<smem>>
    %c0_0 = arith.constant 0 : index
    %c0_1 = arith.constant 0 : index
    %2 = vector.load %arg3[%c0_0, %c0_1] : memref<8x256xf32, #tpu.memory_space<vmem>>, vector<8x256xf32>
    %3 = vector.broadcast %0 : f32 to vector<8x256xf32>
    %4 = arith.mulf %2, %3 : vector<8x256xf32>
    %5 = vector.broadcast %1 : f32 to vector<8x256xf32>
    %6 = arith.addf %4, %5 : vector<8x256xf32>
    %cst = arith.constant 0.000000e+00 : f32
    %7 = vector.broadcast %cst : f32 to vector<8x256xf32>
    %8 = arith.maximumf %6, %7 : vector<8x256xf32>
    %cst_2 = arith.constant dense<0.000000e+00> : vector<8xf32>
    %9 = vector.multi_reduction <add>, %8, %cst_2 [1] : vector<8x256xf32> to vector<8xf32>
    %10 = vector.shape_cast %9 : vector<8xf32> to vector<8x1xf32>
    %cst_3 = arith.constant 2.560000e+02 : f32
    %11 = vector.broadcast %cst_3 : f32 to vector<8x1xf32>
    %12 = arith.divf %10, %11 : vector<8x1xf32>
    %c0_4 = arith.constant 0 : index
    %c0_5 = arith.constant 0 : index
    %13 = vector.load %arg2[%c0_4, %c0_5] : memref<8x16xf32, #tpu.memory_space<vmem>>, vector<8x16xf32>
    %14 = arith.truncf %13 : vector<8x16xf32> to vector<8x16xbf16>
    %c0_6 = arith.constant 0 : index
    %c0_7 = arith.constant 0 : index
    %15 = vector.load %arg4[%c0_6, %c0_7] : memref<16x256xbf16, #tpu.memory_space<vmem>>, vector<16x256xbf16>
    %cst_8 = arith.constant dense<0.000000e+00> : vector<8x256xf32>
    %16 = tpu.matmul %14, %15, %cst_8 {dimension_numbers = #tpu.dot_dimension_numbers<[1], [0], [0], [1], [0, 0, 1, 1], [], []>} : vector<8x16xbf16>, vector<16x256xbf16>, vector<8x256xf32> -> vector<8x256xf32>
    %c0_9 = arith.constant 0 : index
    %c0_10 = arith.constant 0 : index
    %17 = vector.load %arg5[%c0_9, %c0_10] : memref<1x256xf32, #tpu.memory_space<vmem>>, vector<1x256xf32>
    %18 = vector.broadcast %12 : vector<8x1xf32> to vector<8x256xf32>
    %19 = vector.broadcast %17 : vector<1x256xf32> to vector<8x256xf32>
    %20 = arith.mulf %18, %19 : vector<8x256xf32>
    %21 = arith.addf %16, %20 : vector<8x256xf32>
    %c0_11 = arith.constant 0 : index
    %c0_12 = arith.constant 0 : index
    %22 = vector.load %arg6[%c0_11, %c0_12] : memref<1x256xf32, #tpu.memory_space<vmem>>, vector<1x256xf32>
    %23 = vector.broadcast %22 : vector<1x256xf32> to vector<8x256xf32>
    %24 = arith.addf %21, %23 : vector<8x256xf32>
    %cst_13 = arith.constant 0.000000e+00 : f32
    %25 = vector.broadcast %cst_13 : f32 to vector<8x256xf32>
    %26 = arith.maximumf %24, %25 : vector<8x256xf32>
    %27 = arith.truncf %26 : vector<8x256xf32> to vector<8x256xbf16>
    %c0_14 = arith.constant 0 : index
    %c0_15 = arith.constant 0 : index
    %28 = vector.load %arg7[%c0_14, %c0_15] : memref<256x128xbf16, #tpu.memory_space<vmem>>, vector<256x128xbf16>
    %cst_16 = arith.constant dense<0.000000e+00> : vector<8x128xf32>
    %29 = tpu.matmul %27, %28, %cst_16 {dimension_numbers = #tpu.dot_dimension_numbers<[1], [0], [0], [1], [0, 0, 1, 1], [], []>} : vector<8x256xbf16>, vector<256x128xbf16>, vector<8x128xf32> -> vector<8x128xf32>
    %c0_17 = arith.constant 0 : index
    %c0_18 = arith.constant 0 : index
    %30 = vector.load %arg8[%c0_17, %c0_18] : memref<1x128xf32, #tpu.memory_space<vmem>>, vector<1x128xf32>
    %31 = vector.broadcast %30 : vector<1x128xf32> to vector<8x128xf32>
    %32 = arith.addf %29, %31 : vector<8x128xf32>
    %cst_19 = arith.constant 0.000000e+00 : f32
    %33 = vector.broadcast %cst_19 : f32 to vector<8x128xf32>
    %34 = arith.maximumf %32, %33 : vector<8x128xf32>
    %35 = arith.truncf %34 : vector<8x128xf32> to vector<8x128xbf16>
    %c0_20 = arith.constant 0 : index
    %c0_21 = arith.constant 0 : index
    %36 = vector.load %arg9[%c0_20, %c0_21] : memref<128x128xbf16, #tpu.memory_space<vmem>>, vector<128x128xbf16>
    %cst_22 = arith.constant dense<0.000000e+00> : vector<8x128xf32>
    %37 = tpu.matmul %35, %36, %cst_22 {dimension_numbers = #tpu.dot_dimension_numbers<[1], [0], [0], [1], [0, 0, 1, 1], [], []>} : vector<8x128xbf16>, vector<128x128xbf16>, vector<8x128xf32> -> vector<8x128xf32>
    %c0_23 = arith.constant 0 : index
    %c0_24 = arith.constant 0 : index
    %38 = vector.load %arg10[%c0_23, %c0_24] : memref<1x128xf32, #tpu.memory_space<vmem>>, vector<1x128xf32>
    %39 = vector.broadcast %38 : vector<1x128xf32> to vector<8x128xf32>
    %40 = arith.addf %37, %39 : vector<8x128xf32>
    %cst_25 = arith.constant 0.000000e+00 : f32
    %41 = vector.broadcast %cst_25 : f32 to vector<8x128xf32>
    %42 = arith.maximumf %40, %41 : vector<8x128xf32>
    %43 = arith.truncf %42 : vector<8x128xf32> to vector<8x128xbf16>
    %c0_26 = arith.constant 0 : index
    %c0_27 = arith.constant 0 : index
    %44 = vector.load %arg11[%c0_26, %c0_27] : memref<128x8xbf16, #tpu.memory_space<vmem>>, vector<128x8xbf16>
    %cst_28 = arith.constant dense<0.000000e+00> : vector<8x8xf32>
    %45 = tpu.matmul %43, %44, %cst_28 {dimension_numbers = #tpu.dot_dimension_numbers<[1], [0], [0], [1], [0, 0, 1, 1], [], []>} : vector<8x128xbf16>, vector<128x8xbf16>, vector<8x8xf32> -> vector<8x8xf32>
    %c0_29 = arith.constant 0 : index
    %c0_30 = arith.constant 0 : index
    %46 = vector.load %arg12[%c0_29, %c0_30] : memref<1x8xf32, #tpu.memory_space<vmem>>, vector<1x8xf32>
    %47 = vector.broadcast %46 : vector<1x8xf32> to vector<8x8xf32>
    %48 = arith.addf %45, %47 : vector<8x8xf32>
    %c0_31 = arith.constant 0 : index
    %c0_32 = arith.constant 0 : index
    %49 = vector.load %arg13[%c0_31, %c0_32] : memref<8x8xf32, #tpu.memory_space<vmem>>, vector<8x8xf32>
    tpu.vector_store %arg13[%c0_31, %c0_32], %48 {strides = array<i32>} : memref<8x8xf32, #tpu.memory_space<vmem>>, vector<8x8xf32>,
    return
  }
  func.func @transform_0(%arg0: i32, %arg1: memref<2xf32, #tpu.memory_space<smem>>) -> (i32, i32) {
    %c0_i32 = arith.constant 0 : i32
    %c0_i32_0 = arith.constant 0 : i32
    return %arg0, %c0_i32 : i32, i32
  }
  func.func @transform_1(%arg0: i32, %arg1: memref<2xf32, #tpu.memory_space<smem>>) -> (i32, i32) {
    %c0_i32 = arith.constant 0 : i32
    %c0_i32_0 = arith.constant 0 : i32
    return %arg0, %c0_i32 : i32, i32
  }
  func.func @transform_2(%arg0: i32, %arg1: memref<2xf32, #tpu.memory_space<smem>>) -> (i32, i32) {
    %c0_i32 = arith.constant 0 : i32
    %c0_i32_0 = arith.constant 0 : i32
    %c0_i32_1 = arith.constant 0 : i32
    return %c0_i32, %c0_i32_0 : i32, i32
  }
  func.func @transform_3(%arg0: i32, %arg1: memref<2xf32, #tpu.memory_space<smem>>) -> (i32, i32) {
    %c0_i32 = arith.constant 0 : i32
    %c0_i32_0 = arith.constant 0 : i32
    %c0_i32_1 = arith.constant 0 : i32
    return %c0_i32, %c0_i32_0 : i32, i32
  }
  func.func @transform_4(%arg0: i32, %arg1: memref<2xf32, #tpu.memory_space<smem>>) -> (i32, i32) {
    %c0_i32 = arith.constant 0 : i32
    %c0_i32_0 = arith.constant 0 : i32
    %c0_i32_1 = arith.constant 0 : i32
    return %c0_i32, %c0_i32_0 : i32, i32
  }
  func.func @transform_5(%arg0: i32, %arg1: memref<2xf32, #tpu.memory_space<smem>>) -> (i32, i32) {
    %c0_i32 = arith.constant 0 : i32
    %c0_i32_0 = arith.constant 0 : i32
    %c0_i32_1 = arith.constant 0 : i32
    return %c0_i32, %c0_i32_0 : i32, i32
  }
  func.func @transform_6(%arg0: i32, %arg1: memref<2xf32, #tpu.memory_space<smem>>) -> (i32, i32) {
    %c0_i32 = arith.constant 0 : i32
    %c0_i32_0 = arith.constant 0 : i32
    %c0_i32_1 = arith.constant 0 : i32
    return %c0_i32, %c0_i32_0 : i32, i32
  }
  func.func @transform_7(%arg0: i32, %arg1: memref<2xf32, #tpu.memory_space<smem>>) -> (i32, i32) {
    %c0_i32 = arith.constant 0 : i32
    %c0_i32_0 = arith.constant 0 : i32
    %c0_i32_1 = arith.constant 0 : i32
    return %c0_i32, %c0_i32_0 : i32, i32
  }
  func.func @transform_8(%arg0: i32, %arg1: memref<2xf32, #tpu.memory_space<smem>>) -> (i32, i32) {
    %c0_i32 = arith.constant 0 : i32
    %c0_i32_0 = arith.constant 0 : i32
    %c0_i32_1 = arith.constant 0 : i32
    return %c0_i32, %c0_i32_0 : i32, i32
  }
  func.func @transform_9(%arg0: i32, %arg1: memref<2xf32, #tpu.memory_space<smem>>) -> (i32, i32) {
    %c0_i32 = arith.constant 0 : i32
    %c0_i32_0 = arith.constant 0 : i32
    %c0_i32_1 = arith.constant 0 : i32
    return %c0_i32, %c0_i32_0 : i32, i32
  }
  func.func @transform_10(%arg0: i32, %arg1: memref<2xf32, #tpu.memory_space<smem>>) -> (i32, i32) {
    %c0_i32 = arith.constant 0 : i32
    %c0_i32_0 = arith.constant 0 : i32
    %c0_i32_1 = arith.constant 0 : i32
    return %c0_i32, %c0_i32_0 : i32, i32
  }
  func.func @transform_11(%arg0: i32, %arg1: memref<2xf32, #tpu.memory_space<smem>>) -> (i32, i32) {
    %c0_i32 = arith.constant 0 : i32
    %c0_i32_0 = arith.constant 0 : i32
    return %arg0, %c0_i32 : i32, i32
  }
}

</mosaic_0001>

<llo_original>
// kernel: classifier_forward.1
$region0: #{classifier_forward.1}
  #allocation0 [shape = 'u32[]', space=smem, size = 0x4, offset = 0x4, fixed_abs, tag = 'smem constant byte address 0x4 - core index']
  #allocation1 [shape = 'u32[72,128]{1,0:T(1,128)}', space=vmem, size = 0x9000, scoped, tag = 'internal scratch']
  #allocation2 [shape = 's32[1]{0}', space=sflag, size = 0x4, scoped, tag = 'scoped memory for classifier_forward.1']
  #allocation3 [shape = 'u8[512]{0}', space=smem, size = 0x200, scoped, tag = 'prefetched SMEM operand 0']
  %s0 = inlined_call_operand.vmem [shape: f32[2], index: 0, kind: input, shape index: {}]
  %s1 = inlined_call_operand.vmem [shape: f32[2,16], index: 1, kind: input, shape index: {}]
  %s2 = inlined_call_operand.vmem [shape: f32[2,256], index: 2, kind: input, shape index: {}]
  %s3 = inlined_call_operand.vmem [shape: bf16[16,256], index: 3, kind: input, shape index: {}]
  %s4 = inlined_call_operand.vmem [shape: f32[1,256], index: 4, kind: input, shape index: {}]
  %s5 = inlined_call_operand.vmem [shape: f32[1,256], index: 5, kind: input, shape index: {}]
  %s6 = inlined_call_operand.vmem [shape: bf16[256,128], index: 6, kind: input, shape index: {}]
  %s7 = inlined_call_operand.vmem [shape: f32[1,128], index: 7, kind: input, shape index: {}]
  %s8 = inlined_call_operand.vmem [shape: bf16[128,128], index: 8, kind: input, shape index: {}]
  %s9 = inlined_call_operand.vmem [shape: f32[1,128], index: 9, kind: input, shape index: {}]
  %s10 = inlined_call_operand.vmem [shape: bf16[128,8], index: 10, kind: input, shape index: {}]
  %s11 = inlined_call_operand.vmem [shape: f32[1,8], index: 11, kind: input, shape index: {}]
  %s12 = inlined_call_operand.hbm [shape: f32[2,8], index: 12, kind: output, shape index: {}]
  %s13 = sld [smem:[#allocation0]]
  $region54: #{classifier_forward.1} parent=0
    _
  %s15 = ssub.s32 1, %s13
  %s16 = scalar_select 0, %s15, %s13
  %s18 = sshll.u32 %s0, 4
  %s19 = int_to_ptr.vmem [resolvable:$true] %s18
  %21 = dma.vmem_to_smem %s19, 16, [#allocation3], [#allocation2]
  %23 = dma.done [#allocation2], 16
  %24 = sfence
  $region1: #{classifier_forward.1} parent=0
    #allocation4 [shape = 'u8[4096]{0}', space=vmem, size = 0x1000, scoped, tag = 'output window, operand 0, single buffered']
    #allocation5 [shape = 's32[1]{0}', space=sflag, size = 0x4, scoped, tag = 'scoped memory for classifier_forward.1']
    %25 = vsyncpa [#allocation5], 0
    // Predicated region
    $region2: #{classifier_forward.1} parent=1 // pred_check
      _
    $region3: #{classifier_forward.1} parent=1 // pred_check_branch
      %27 = sbr.rel (0) target = $region5
    $region4: #{classifier_forward.1} parent=1 // pred_region
      _
    $region5: #{classifier_forward.1} parent=1 // pred_fallthru
      _
    // Predicated region
    $region6: #{classifier_forward.1} parent=1 // pred_check
      _
    $region7: #{classifier_forward.1} parent=1 // pred_check_branch
      %29 = sbr.rel (0) target = $region9
    $region8: #{classifier_forward.1} parent=1 // pred_region
      _
    $region9: #{classifier_forward.1} parent=1 // pred_fallthru
      _
    // Predicated region
    $region10: #{classifier_forward.1} parent=1 // pred_check
      _
    $region11: #{classifier_forward.1} parent=1 // pred_check_branch
      %31 = sbr.rel (0) target = $region13
    $region12: #{classifier_forward.1} parent=1 // pred_region
      _
    $region13: #{classifier_forward.1} parent=1 // pred_fallthru
      _
    // Predicated region
    $region14: #{classifier_forward.1} parent=1 // pred_check
      _
    $region15: #{classifier_forward.1} parent=1 // pred_check_branch
      %33 = sbr.rel (0) target = $region17
    $region16: #{classifier_forward.1} parent=1 // pred_region
      _
    $region17: #{classifier_forward.1} parent=1 // pred_fallthru
      _
    // Predicated region
    $region18: #{classifier_forward.1} parent=1 // pred_check
      _
    $region19: #{classifier_forward.1} parent=1 // pred_check_branch
      %35 = sbr.rel (0) target = $region21
    $region20: #{classifier_forward.1} parent=1 // pred_region
      _
    $region21: #{classifier_forward.1} parent=1 // pred_fallthru
      _
    // Predicated region
    $region22: #{classifier_forward.1} parent=1 // pred_check
      _
    $region23: #{classifier_forward.1} parent=1 // pred_check_branch
      %37 = sbr.rel (0) target = $region25
    $region24: #{classifier_forward.1} parent=1 // pred_region
      _
    $region25: #{classifier_forward.1} parent=1 // pred_fallthru
      _
    // Predicated region
    $region26: #{classifier_forward.1} parent=1 // pred_check
      _
    $region27: #{classifier_forward.1} parent=1 // pred_check_branch
      %39 = sbr.rel (0) target = $region29
    $region28: #{classifier_forward.1} parent=1 // pred_region
      _
    $region29: #{classifier_forward.1} parent=1 // pred_fallthru
      _
    // Predicated region
    $region30: #{classifier_forward.1} parent=1 // pred_check
      _
    $region31: #{classifier_forward.1} parent=1 // pred_check_branch
      %41 = sbr.rel (0) target = $region33
    $region32: #{classifier_forward.1} parent=1 // pred_region
      _
    $region33: #{classifier_forward.1} parent=1 // pred_fallthru
      _
    // Predicated region
    $region34: #{classifier_forward.1} parent=1 // pred_check
      _
    $region35: #{classifier_forward.1} parent=1 // pred_check_branch
      %43 = sbr.rel (0) target = $region37
    $region36: #{classifier_forward.1} parent=1 // pred_region
      _
    $region37: #{classifier_forward.1} parent=1 // pred_fallthru
      _
    // Predicated region
    $region38: #{classifier_forward.1} parent=1 // pred_check
      _
    $region39: #{classifier_forward.1} parent=1 // pred_check_branch
      %45 = sbr.rel (0) target = $region41
    $region40: #{classifier_forward.1} parent=1 // pred_region
      _
    $region41: #{classifier_forward.1} parent=1 // pred_fallthru
      _
    // Predicated region
    $region42: #{classifier_forward.1} parent=1 // pred_check
      _
    $region43: #{classifier_forward.1} parent=1 // pred_check_branch
      %47 = sbr.rel (0) target = $region45
    $region44: #{classifier_forward.1} parent=1 // pred_region
      _
    $region45: #{classifier_forward.1} parent=1 // pred_fallthru
      _
    %s49 = sld [smem:[#allocation3]]
    %s50 = sld [smem:[#allocation3 + $0x1]]
    %v51 = vld [vmem:[%s2] sm:$0xf]
    %v52 = vld [vmem:[%s2 + $0x4] sm:$0xf]
    %v53 = vld [vmem:[%s2 + $0x8] sm:$0xf]
    %v54 = vld [vmem:[%s2 + $0xc] sm:$0xf]
    %v55 = vstv %s49
    %v56 = vmul.f32 %v51, %v55
    %v57 = vmul.f32 %v52, %v55
    %v58 = vmul.f32 %v53, %v55
    %v59 = vmul.f32 %v54, %v55
    %v60 = vstv %s50
    %v61 = vadd.f32 %v56, %v60
    %v62 = vadd.f32 %v57, %v60
    %v63 = vadd.f32 %v58, %v60
    %v64 = vadd.f32 %v59, %v60
    %v65 = vmax.f32 %v61, 0.0
    %v66 = vmax.f32 %v62, 0.0
    %v67 = vmax.f32 %v63, 0.0
    %v68 = vmax.f32 %v64, 0.0
    %73 = vst [vmem:[#allocation1] ss:$4 sm:$0xff] %v65
    %s74 = scalar_lea.vmem [#allocation1], 1
    %75 = vst [vmem:[%s74] ss:$4 sm:$0xff] %v66
    %s76 = scalar_lea.vmem [#allocation1], 2
    %77 = vst [vmem:[%s76] ss:$4 sm:$0xff] %v67
    %s78 = scalar_lea.vmem [#allocation1], 3
    %79 = vst [vmem:[%s78] ss:$4 sm:$0xff] %v68
    %v80 = vld.sshfl [vmem:[#allocation1] sm:$0xff pattern:$0x73625140]
    %v81 = vld.sshfl [vmem:[#allocation1 + $0x8] sm:$0xff pattern:$0x73625140]
    %v84 = vadd.f32 %v80, %v81
    %85 = vadd.xlane.f32.xlu0 %v84
    %v86 = vpop.xlane.xlu0 %85
    %v87 = vrcp.pop 256.0
    %v88 = vmul.f32 256.0, %v87
    %v89 = vsub.f32 1.0, %v88
    %v90 = vmul.f32 %v87, %v89
    %v91 = vadd.f32 %v87, %v90
    %vm92 = vweird.f32 %v87
    %v93 = vsel %vm92, %v87, %v91
    %v94 = vmul.f32 %v86, %v93
    %v95 = vld [vmem:[%s1] sm:$0xff]
    %v96 = vpack.c.bf16 %v95, %v95
    %v97 = vld [vmem:[%s3] sm:$0xff]
    %v98 = vld [vmem:[%s3 + $0x8] sm:$0xff]
    %v99 = vld [vmem:[%s4] sm:$0x3]
    %v101 = vperm.slane %v99, 0
    %v102 = vperm.slane %v99, 1
    %v105 = vmul.f32 %v94, %v101
    %v106 = vmul.f32 %v94, %v102
    %v109 = vunpack.c.l.b16 %v97
    %v110 = vunpack.c.h.b16 %v97
    %v111 = vunpack.c.l.b16 %v98
    %v112 = vunpack.c.h.b16 %v98
    %v113 = vpack.c.b16 %v111, %v109
    %v114 = vpack.c.b16 %v112, %v110
    %vm117 = vcmask 130048
    %v119 = vsel %vm117, %v96, 0
    %121 = vmatpush.bf16.msra.mxu0 0
    %122 = vmatpush.bf16.msra.mxu0 0
    %123 = vmatpush.bf16.msra.mxu0 0
    %124 = vmatpush.bf16.msra.mxu0 0
    %125 = vmatpush.bf16.msra.mxu0 0
    %126 = vmatpush.bf16.msra.mxu0 0
    %127 = vmatpush.bf16.msra.mxu0 0
    %128 = vmatpush.bf16.msra.mxu0 %v113
    %129 = vmatmul.bf16.gmra.mxu0 %v119
    %v130 = vpop.f32.mrf.mxu0
    %v131 = vadd.f32 %v105, %v130
    %v132 = vpop.f32.mrf.mxu0
    %133 = vdwg.mxu0
    %134 = vmatpush.bf16.msra.mxu0 0
    %135 = vmatpush.bf16.msra.mxu0 0
    %136 = vmatpush.bf16.msra.mxu0 0
    %137 = vmatpush.bf16.msra.mxu0 0
    %138 = vmatpush.bf16.msra.mxu0 0
    %139 = vmatpush.bf16.msra.mxu0 0
    %140 = vmatpush.bf16.msra.mxu0 0
    %141 = vmatpush.bf16.msra.mxu0 %v114
    %142 = vmatmul.bf16.gmra.mxu0 %v119
    %v143 = vpop.f32.mrf.mxu0
    %v144 = vadd.f32 %v106, %v143
    %v145 = vpop.f32.mrf.mxu0
    %146 = vdwg.mxu0
    %v147 = vld [vmem:[%s5] sm:$0x3]
    %v149 = vperm.slane %v147, 0
    %v150 = vperm.slane %v147, 1
    %v153 = vadd.f32 %v131, %v149
    %v154 = vadd.f32 %v144, %v150
    %v155 = vmax.f32 %v153, 0.0
    %v156 = vmax.f32 %v154, 0.0
    %v157 = vpack.c.bf16 %v155, %v155
    %v158 = vpack.c.bf16 %v156, %v156
    %v159 = vld [vmem:[%s6] sm:$0xf]
    %v160 = vld [vmem:[%s6 + $0x4] sm:$0xf]
    %v161 = vld [vmem:[%s6 + $0x8] sm:$0xf]
    %v162 = vld [vmem:[%s6 + $0xc] sm:$0xf]
    %v163 = vld [vmem:[%s6 + $0x10] sm:$0xf]
    %v164 = vld [vmem:[%s6 + $0x14] sm:$0xf]
    %v165 = vld [vmem:[%s6 + $0x18] sm:$0xf]
    %v166 = vld [vmem:[%s6 + $0x1c] sm:$0xf]
    %v167 = vld [vmem:[%s6 + $0x20] sm:$0xf]
    %v168 = vld [vmem:[%s6 + $0x24] sm:$0xf]
    %v169 = vld [vmem:[%s6 + $0x28] sm:$0xf]
    %v170 = vld [vmem:[%s6 + $0x2c] sm:$0xf]
    %v171 = vld [vmem:[%s6 + $0x30] sm:$0xf]
    %v172 = vld [vmem:[%s6 + $0x34] sm:$0xf]
    %v173 = vld [vmem:[%s6 + $0x38] sm:$0xf]
    %v174 = vld [vmem:[%s6 + $0x3c] sm:$0xf]
    %v175 = vld [vmem:[%s6 + $0x40] sm:$0xf]
    %v176 = vld [vmem:[%s6 + $0x44] sm:$0xf]
    %v177 = vld [vmem:[%s6 + $0x48] sm:$0xf]
    %v178 = vld [vmem:[%s6 + $0x4c] sm:$0xf]
    %v179 = vld [vmem:[%s6 + $0x50] sm:$0xf]
    %v180 = vld [vmem:[%s6 + $0x54] sm:$0xf]
    %v181 = vld [vmem:[%s6 + $0x58] sm:$0xf]
    %v182 = vld [vmem:[%s6 + $0x5c] sm:$0xf]
    %v183 = vld [vmem:[%s6 + $0x60] sm:$0xf]
    %v184 = vld [vmem:[%s6 + $0x64] sm:$0xf]
    %v185 = vld [vmem:[%s6 + $0x68] sm:$0xf]
    %v186 = vld [vmem:[%s6 + $0x6c] sm:$0xf]
    %v187 = vld [vmem:[%s6 + $0x70] sm:$0xf]
    %v188 = vld [vmem:[%s6 + $0x74] sm:$0xf]
    %v189 = vld [vmem:[%s6 + $0x78] sm:$0xf]
    %v190 = vld [vmem:[%s6 + $0x7c] sm:$0xf]
    %v191 = vld [vmem:[%s7] sm:$0x1]
    %v193 = vperm.slane %v191, 0
    %v227 = vunpack.c.l.b16 %v159
    %v228 = vunpack.c.l.b16 %v160
    %v229 = vunpack.c.l.b16 %v161
    %v230 = vunpack.c.l.b16 %v162
    %v231 = vunpack.c.l.b16 %v163
    %v232 = vunpack.c.l.b16 %v164
    %v233 = vunpack.c.l.b16 %v165
    %v234 = vunpack.c.l.b16 %v166
    %v235 = vunpack.c.l.b16 %v167
    %v236 = vunpack.c.l.b16 %v168
    %v237 = vunpack.c.l.b16 %v169
    %v238 = vunpack.c.l.b16 %v170
    %v239 = vunpack.c.l.b16 %v171
    %v240 = vunpack.c.l.b16 %v172
    %v241 = vunpack.c.l.b16 %v173
    %v242 = vunpack.c.l.b16 %v174
    %v243 = vunpack.c.l.b16 %v175
    %v244 = vunpack.c.l.b16 %v176
    %v245 = vunpack.c.l.b16 %v177
    %v246 = vunpack.c.l.b16 %v178
    %v247 = vunpack.c.l.b16 %v179
    %v248 = vunpack.c.l.b16 %v180
    %v249 = vunpack.c.l.b16 %v181
    %v250 = vunpack.c.l.b16 %v182
    %v251 = vunpack.c.l.b16 %v183
    %v252 = vunpack.c.l.b16 %v184
    %v253 = vunpack.c.l.b16 %v185
    %v254 = vunpack.c.l.b16 %v186
    %v255 = vunpack.c.l.b16 %v187
    %v256 = vunpack.c.l.b16 %v188
    %v257 = vunpack.c.l.b16 %v189
    %v258 = vunpack.c.l.b16 %v190
    %v259 = vpack.c.b16 %v228, %v227
    %v260 = vpack.c.b16 %v230, %v229
    %v261 = vpack.c.b16 %v232, %v231
    %v262 = vpack.c.b16 %v234, %v233
    %v263 = vpack.c.b16 %v236, %v235
    %v264 = vpack.c.b16 %v238, %v237
    %v265 = vpack.c.b16 %v240, %v239
    %v266 = vpack.c.b16 %v242, %v241
    %v267 = vpack.c.b16 %v244, %v243
    %v268 = vpack.c.b16 %v246, %v245
    %v269 = vpack.c.b16 %v248, %v247
    %v270 = vpack.c.b16 %v250, %v249
    %v271 = vpack.c.b16 %v252, %v251
    %v272 = vpack.c.b16 %v254, %v253
    %v273 = vpack.c.b16 %v256, %v255
    %v274 = vpack.c.b16 %v258, %v257
    %291 = vmatpush.bf16.msra.mxu0 %v266
    %292 = vmatpush.bf16.msra.mxu0 %v265
    %293 = vmatpush.bf16.msra.mxu0 %v264
    %294 = vmatpush.bf16.msra.mxu0 %v263
    %295 = vmatpush.bf16.msra.mxu0 %v262
    %296 = vmatpush.bf16.msra.mxu0 %v261
    %297 = vmatpush.bf16.msra.mxu0 %v260
    %298 = vmatpush.bf16.msra.mxu0 %v259
    %299 = vmatmul.bf16.gmra.mxu0 %v157
    %v300 = vpop.f32.mrf.mxu0
    %v301 = vadd.f32 %v193, %v300
    %v302 = vpop.f32.mrf.mxu0
    %303 = vdwg.mxu0
    %304 = vmatpush.bf16.msra.mxu0 %v274
    %305 = vmatpush.bf16.msra.mxu0 %v273
    %306 = vmatpush.bf16.msra.mxu0 %v272
    %307 = vmatpush.bf16.msra.mxu0 %v271
    %308 = vmatpush.bf16.msra.mxu0 %v270
    %309 = vmatpush.bf16.msra.mxu0 %v269
    %310 = vmatpush.bf16.msra.mxu0 %v268
    %311 = vmatpush.bf16.msra.mxu0 %v267
    %312 = vmatmul.bf16.gmra.mxu0 %v158
    %v313 = vpop.f32.mrf.mxu0
    %v314 = vadd.f32 %v301, %v313
    %v315 = vpop.f32.mrf.mxu0
    %316 = vdwg.mxu0
    %v317 = vmax.f32 %v314, 0.0
    %v318 = vpack.c.bf16 %v317, %v317
    %v319 = vld [vmem:[%s8] sm:$0xf]
    %v320 = vld [vmem:[%s8 + $0x4] sm:$0xf]
    %v321 = vld [vmem:[%s8 + $0x8] sm:$0xf]
    %v322 = vld [vmem:[%s8 + $0xc] sm:$0xf]
    %v323 = vld [vmem:[%s8 + $0x10] sm:$0xf]
    %v324 = vld [vmem:[%s8 + $0x14] sm:$0xf]
    %v325 = vld [vmem:[%s8 + $0x18] sm:$0xf]
    %v326 = vld [vmem:[%s8 + $0x1c] sm:$0xf]
    %v327 = vld [vmem:[%s8 + $0x20] sm:$0xf]
    %v328 = vld [vmem:[%s8 + $0x24] sm:$0xf]
    %v329 = vld [vmem:[%s8 + $0x28] sm:$0xf]
    %v330 = vld [vmem:[%s8 + $0x2c] sm:$0xf]
    %v331 = vld [vmem:[%s8 + $0x30] sm:$0xf]
    %v332 = vld [vmem:[%s8 + $0x34] sm:$0xf]
    %v333 = vld [vmem:[%s8 + $0x38] sm:$0xf]
    %v334 = vld [vmem:[%s8 + $0x3c] sm:$0xf]
    %v335 = vld [vmem:[%s9] sm:$0x1]
    %v337 = vperm.slane %v335, 0
    %v355 = vunpack.c.l.b16 %v319
    %v356 = vunpack.c.l.b16 %v320
    %v357 = vunpack.c.l.b16 %v321
    %v358 = vunpack.c.l.b16 %v322
    %v359 = vunpack.c.l.b16 %v323
    %v360 = vunpack.c.l.b16 %v324
    %v361 = vunpack.c.l.b16 %v325
    %v362 = vunpack.c.l.b16 %v326
    %v363 = vunpack.c.l.b16 %v327
    %v364 = vunpack.c.l.b16 %v328
    %v365 = vunpack.c.l.b16 %v329
    %v366 = vunpack.c.l.b16 %v330
    %v367 = vunpack.c.l.b16 %v331
    %v368 = vunpack.c.l.b16 %v332
    %v369 = vunpack.c.l.b16 %v333
    %v370 = vunpack.c.l.b16 %v334
    %v371 = vpack.c.b16 %v356, %v355
    %v372 = vpack.c.b16 %v358, %v357
    %v373 = vpack.c.b16 %v360, %v359
    %v374 = vpack.c.b16 %v362, %v361
    %v375 = vpack.c.b16 %v364, %v363
    %v376 = vpack.c.b16 %v366, %v365
    %v377 = vpack.c.b16 %v368, %v367
    %v378 = vpack.c.b16 %v370, %v369
    %387 = vmatpush.bf16.msra.mxu0 %v378
    %388 = vmatpush.bf16.msra.mxu0 %v377
    %389 = vmatpush.bf16.msra.mxu0 %v376
    %390 = vmatpush.bf16.msra.mxu0 %v375
    %391 = vmatpush.bf16.msra.mxu0 %v374
    %392 = vmatpush.bf16.msra.mxu0 %v373
    %393 = vmatpush.bf16.msra.mxu0 %v372
    %394 = vmatpush.bf16.msra.mxu0 %v371
    %395 = vmatmul.bf16.gmra.mxu0 %v318
    %v396 = vpop.f32.mrf.mxu0
    %v397 = vadd.f32 %v337, %v396
    %v398 = vpop.f32.mrf.mxu0
    %399 = vdwg.mxu0
    %v400 = vmax.f32 %v397, 0.0
    %v401 = vpack.c.bf16 %v400, %v400
    %v402 = vld [vmem:[%s10] sm:$0xf]
    %v403 = vld [vmem:[%s10 + $0x4] sm:$0xf]
    %v404 = vld [vmem:[%s10 + $0x8] sm:$0xf]
    %v405 = vld [vmem:[%s10 + $0xc] sm:$0xf]
    %v406 = vld [vmem:[%s10 + $0x10] sm:$0xf]
    %v407 = vld [vmem:[%s10 + $0x14] sm:$0xf]
    %v408 = vld [vmem:[%s10 + $0x18] sm:$0xf]
    %v409 = vld [vmem:[%s10 + $0x1c] sm:$0xf]
    %v410 = vld [vmem:[%s10 + $0x20] sm:$0xf]
    %v411 = vld [vmem:[%s10 + $0x24] sm:$0xf]
    %v412 = vld [vmem:[%s10 + $0x28] sm:$0xf]
    %v413 = vld [vmem:[%s10 + $0x2c] sm:$0xf]
    %v414 = vld [vmem:[%s10 + $0x30] sm:$0xf]
    %v415 = vld [vmem:[%s10 + $0x34] sm:$0xf]
    %v416 = vld [vmem:[%s10 + $0x38] sm:$0xf]
    %v417 = vld [vmem:[%s10 + $0x3c] sm:$0xf]
    %v418 = vld [vmem:[%s11] sm:$0x1]
    %v420 = vperm.slane %v418, 0
    %v438 = vunpack.c.l.b16 %v402
    %v439 = vunpack.c.l.b16 %v403
    %v440 = vunpack.c.l.b16 %v404
    %v441 = vunpack.c.l.b16 %v405
    %v442 = vunpack.c.l.b16 %v406
    %v443 = vunpack.c.l.b16 %v407
    %v444 = vunpack.c.l.b16 %v408
    %v445 = vunpack.c.l.b16 %v409
    %v446 = vunpack.c.l.b16 %v410
    %v447 = vunpack.c.l.b16 %v411
    %v448 = vunpack.c.l.b16 %v412
    %v449 = vunpack.c.l.b16 %v413
    %v450 = vunpack.c.l.b16 %v414
    %v451 = vunpack.c.l.b16 %v415
    %v452 = vunpack.c.l.b16 %v416
    %v453 = vunpack.c.l.b16 %v417
    %v454 = vpack.c.b16 %v439, %v438
    %v455 = vpack.c.b16 %v441, %v440
    %v456 = vpack.c.b16 %v443, %v442
    %v457 = vpack.c.b16 %v445, %v444
    %v458 = vpack.c.b16 %v447, %v446
    %v459 = vpack.c.b16 %v449, %v448
    %v460 = vpack.c.b16 %v451, %v450
    %v461 = vpack.c.b16 %v453, %v452
    %470 = vmatpush.bf16.msra.mxu0 %v461
    %471 = vmatpush.bf16.msra.mxu0 %v460
    %472 = vmatpush.bf16.msra.mxu0 %v459
    %473 = vmatpush.bf16.msra.mxu0 %v458
    %474 = vmatpush.bf16.msra.mxu0 %v457
    %475 = vmatpush.bf16.msra.mxu0 %v456
    %476 = vmatpush.bf16.msra.mxu0 %v455
    %477 = vmatpush.bf16.msra.mxu0 %v454
    %478 = vmatmul.bf16.gmra.mxu0 %v401
    %v479 = vpop.f32.mrf.mxu0
    %v480 = vadd.f32 %v420, %v479
    %v481 = vpop.f32.mrf.mxu0
    %482 = vdwg.mxu0
    %vm483 = vcmask 64512
    %484 = vst.msk [vmem:[#allocation4] sm:$0xff] %vm483, %v480
    // Predicated region
    $region46: #{classifier_forward.1} parent=1 // pred_check
      _
    $region47: #{classifier_forward.1} parent=1 // pred_check_branch
      %486 = sbr.rel (0) target = $region49
    $region48: #{classifier_forward.1} parent=1 // pred_region
      %488 = vsyncadd [#allocation5], 96
      %s489 = sshll.u32 [#allocation4], 4
      %s490 = int_to_ptr.vmem [resolvable:$true] %s489
      %s491 = sshll.u32 %s12, 4
      %s492 = int_to_ptr.hbm [resolvable:$true] %s491
      %497 = dma.vmem_to_hbm [thread:$0]  %s490, 32, %s492, [#allocation5], 32, 32, 2
    $region49: #{classifier_forward.1} parent=1 // pred_fallthru
      _
    // Predicated region
    $region50: #{classifier_forward.1} parent=1 // pred_check
      _
    $region51: #{classifier_forward.1} parent=1 // pred_check_branch
      %499 = sbr.rel (0) target = $region53
    $region52: #{classifier_forward.1} parent=1 // pred_region
      %501 = dma.done [#allocation5], 128
    $region53: #{classifier_forward.1} parent=1 // pred_fallthru
      _
    %502 = vsyncpa [#allocation5], 1

</llo_original>
